<compile_context>
chip_gen: v5e
topology: v5e:2x2
jax: 0.10.0
libtpu: 0.0.40
codegen_flags: <defaults>
</compile_context>

<pallas_src>
import functools

import jax
import jax.numpy as jnp
from jax.experimental import pallas as pl
from jax.experimental.pallas import tpu as pltpu

EPS = 1e-08


def _rmsnorm_kernel(x_ref, g_ref, o_ref, *, inv_d, eps):
    # x_ref: (tile_rows, emb_dim)  g_ref: (1, emb_dim)  o_ref: (tile_rows, emb_dim)
    x = x_ref[...].astype(jnp.float32)
    # Two-pass variance (matches torch.var(unbiased=False), no cancellation).
    mean = jnp.sum(x, axis=-1, keepdims=True) * inv_d
    d = x - mean
    var = jnp.sum(d * d, axis=-1, keepdims=True) * inv_d
    inv = jax.lax.rsqrt(var + eps)  # EUP
    out = g_ref[...].astype(jnp.float32) * (x * inv)
    o_ref[...] = out.astype(o_ref.dtype)


def _vmem_capacity_bytes():
    try:
        info = pltpu.get_tpu_info()
        cap = getattr(info, "vmem_capacity_bytes", None)
        if cap:
            return int(cap)
    except Exception:
        pass
    return 64 * 1024 * 1024  # conservative: v7x per-TensorCore VMEM


def _round_up(x, m):
    return (x + m - 1) // m * m


def _choose_tile_rows(rows8, emb_lane, dtype_bytes):
    """Multiple-of-8 row tile: ~2 MiB per pipeline buffer, >= 8 grid steps."""
    target_buf = 2 * 1024 * 1024  # mem-bound roofline saturates at a few MiB/buffer
    row_bytes = max(emb_lane * dtype_bytes, 1)
    tile = max(8, min(rows8, (target_buf // row_bytes) // 8 * 8))
    # Keep enough steps for per-core double-buffering and a balanced 2-TC split
    # on v7x (>= ~4 steps per core), when there are enough rows.
    min_steps = 8
    if pl.cdiv(rows8, tile) < min_steps and rows8 >= min_steps * 8:
        tile = max(8, (rows8 // min_steps) // 8 * 8)
    return min(tile, rows8)


def rmsnorm(x, gamma, *, tile_rows=None):
    """x: (..., emb_dim); gamma: (emb_dim,). Returns same shape/dtype as x."""
    orig_shape = x.shape
    emb_dim = orig_shape[-1]
    assert gamma.shape == (emb_dim,)

    x2d = x.reshape(-1, emb_dim)
    rows = x2d.shape[0]
    if rows == 0:
        return x

    dtype_bytes = jnp.dtype(x.dtype).itemsize
    emb_lane = _round_up(emb_dim, 128)  # VMEM layout footprint only (no HBM pad)
    rows8 = _round_up(rows, 8)

    if tile_rows is None:
        tile_rows = _choose_tile_rows(rows8, emb_lane, dtype_bytes)
    else:
        tile_rows = min(max(8, _round_up(int(tile_rows), 8)), rows8)

    grid = (pl.cdiv(rows8, tile_rows),)

    # Pad rows to a multiple of 8 only (cheap); never to the tile size and never
    # along lanes. A partial tail tile is fine: OOB reads are per-row garbage in
    # rows whose writes Pallas masks out; valid rows are untouched.
    xp = x2d if rows8 == rows else jnp.pad(x2d, ((0, rows8 - rows), (0, 0)))
    gp = gamma.reshape(1, emb_dim)

    kernel = functools.partial(_rmsnorm_kernel, inv_d=1.0 / emb_dim, eps=EPS)

    # Scoped VMEM: 2x double-buffered in/out tiles + ~3 full-tile f32 temps
    # (x, x-mean, out) + gamma, with 2x headroom, capped at 3/4 of physical VMEM.
    buf = tile_rows * emb_lane * dtype_bytes
    f32buf = tile_rows * emb_lane * 4
    need = 4 * buf + 3 * f32buf + 2 * emb_lane * 4
    vmem_limit = int(min(_vmem_capacity_bytes() * 3 // 4,
                         max(2 * need, 32 * 1024 * 1024)))

    out2d = pl.pallas_call(
        kernel,
        out_shape=jax.ShapeDtypeStruct((rows8, emb_dim), x.dtype),
        grid_spec=pltpu.PrefetchScalarGridSpec(
            num_scalar_prefetch=0,
            grid=grid,
            in_specs=[
                pl.BlockSpec((tile_rows, emb_dim), lambda i: (i, 0)),
                # gamma: whole array resident in VMEM, DMA'd once, not pipelined.
                pl.BlockSpec(memory_space=pltpu.MemorySpace.VMEM),
            ],
            out_specs=pl.BlockSpec((tile_rows, emb_dim), lambda i: (i, 0)),
        ),
        compiler_params=pltpu.CompilerParams(
            dimension_semantics=("parallel",),
            vmem_limit_bytes=vmem_limit,
        ),
    )(xp, gp)

    if rows8 != rows:
        out2d = out2d[:rows]
    return out2d.reshape(orig_shape)


def rmsnorm_ref(x, gamma):
    xf = x.astype(jnp.float32)
    var = jnp.var(xf, axis=-1, keepdims=True)  # unbiased=False equivalent
    norm_x = xf / jnp.sqrt(var + EPS)
    return (gamma.astype(jnp.float32) * norm_x).astype(x.dtype)


if __name__ == "__main__":
    key = jax.random.PRNGKey(0)
    batch, seq, emb_dim = 2, 8, 32

    x = jax.random.normal(key, (batch, seq, emb_dim), dtype=jnp.float32)
    # deterministic parameter init: nn.Parameter(torch.ones(emb_dim))
    gamma = jnp.ones((emb_dim,), dtype=jnp.float32)

    out = jax.block_until_ready(rmsnorm(x, gamma))
    ref = rmsnorm_ref(x, gamma)
    assert out.shape == x.shape and out.dtype == x.dtype
    assert jnp.allclose(out, ref, atol=1e-5, rtol=1e-5), "mismatch vs reference"

    # ragged row count (rows % 8 != 0): pad-to-8-only path
    x2 = jax.random.normal(jax.random.PRNGKey(1), (3, 5, emb_dim), dtype=jnp.float32)
    out2 = jax.block_until_ready(rmsnorm(x2, gamma))
    assert out2.shape == x2.shape
    assert jnp.allclose(out2, rmsnorm_ref(x2, gamma), atol=1e-5, rtol=1e-5), \
        "mismatch vs reference (ragged rows)"

    # multi-step grid with a partial tail tile (rows8 % tile_rows != 0)
    x3 = jax.random.normal(jax.random.PRNGKey(2), (3, 8, emb_dim), dtype=jnp.float32)
    out3 = jax.block_until_ready(rmsnorm(x3, gamma, tile_rows=16))
    assert jnp.allclose(out3, rmsnorm_ref(x3, gamma), atol=1e-5, rtol=1e-5), \
        "mismatch vs reference (partial tail tile)"

    # lane-dense path: emb_dim a multiple of 128 (unmasked vst on the output)
    emb2 = 256
    g2 = jnp.ones((emb2,), dtype=jnp.float32)
    x4 = jax.random.normal(jax.random.PRNGKey(3), (2, 4, emb2), dtype=jnp.float32)
    out4 = jax.block_until_ready(rmsnorm(x4, g2))
    assert jnp.allclose(out4, rmsnorm_ref(x4, g2), atol=1e-5, rtol=1e-5), \
        "mismatch vs reference (lane-dense emb)"

    print("KERNEL_OK")
</pallas_src>

<mosaic_0001>
module attributes {stable_mosaic.version = 11 : i64} {
  func.func @_rmsnorm_kernel(%arg0: i32, %arg1: memref<16x32xf32, #tpu.memory_space<vmem>>, %arg2: memref<1x32xf32, #tpu.memory_space<vmem>>, %arg3: memref<16x32xf32, #tpu.memory_space<vmem>>) attributes {dimension_semantics = [#tpu.dimension_semantics<parallel>], iteration_bounds = array<i64: 1>, scalar_prefetch = 0 : i64, scratch_operands = 0 : i64, tpu.core_type = #tpu.core_type<tc>, window_params = [{transform_indices = @transform_0, window_bounds = array<i64: 16, 32>}, {pipeline_mode = #tpu.pipeline_mode<synchronous>, transform_indices = @transform_1, window_bounds = array<i64: 1, 32>}, {transform_indices = @transform_2, window_bounds = array<i64: 16, 32>}]} {
    %c0 = arith.constant 0 : index
    %c0_0 = arith.constant 0 : index
    %0 = vector.load %arg1[%c0, %c0_0] : memref<16x32xf32, #tpu.memory_space<vmem>>, vector<16x32xf32>
    %cst = arith.constant dense<0.000000e+00> : vector<16xf32>
    %1 = vector.multi_reduction <add>, %0, %cst [1] : vector<16x32xf32> to vector<16xf32>
    %2 = vector.shape_cast %1 : vector<16xf32> to vector<16x1xf32>
    %cst_1 = arith.constant 3.125000e-02 : f32
    %3 = vector.broadcast %cst_1 : f32 to vector<16x1xf32>
    %4 = arith.mulf %2, %3 : vector<16x1xf32>
    %5 = vector.broadcast %4 : vector<16x1xf32> to vector<16x32xf32>
    %6 = arith.subf %0, %5 : vector<16x32xf32>
    %7 = arith.mulf %6, %6 : vector<16x32xf32>
    %cst_2 = arith.constant dense<0.000000e+00> : vector<16xf32>
    %8 = vector.multi_reduction <add>, %7, %cst_2 [1] : vector<16x32xf32> to vector<16xf32>
    %9 = vector.shape_cast %8 : vector<16xf32> to vector<16x1xf32>
    %cst_3 = arith.constant 3.125000e-02 : f32
    %10 = vector.broadcast %cst_3 : f32 to vector<16x1xf32>
    %11 = arith.mulf %9, %10 : vector<16x1xf32>
    %cst_4 = arith.constant 9.99999993E-9 : f32
    %12 = vector.broadcast %cst_4 : f32 to vector<16x1xf32>
    %13 = arith.addf %11, %12 : vector<16x1xf32>
    %14 = math.rsqrt %13 : vector<16x1xf32>
    %c0_5 = arith.constant 0 : index
    %c0_6 = arith.constant 0 : index
    %15 = vector.load %arg2[%c0_5, %c0_6] : memref<1x32xf32, #tpu.memory_space<vmem>>, vector<1x32xf32>
    %16 = vector.broadcast %14 : vector<16x1xf32> to vector<16x32xf32>
    %17 = arith.mulf %0, %16 : vector<16x32xf32>
    %18 = vector.broadcast %15 : vector<1x32xf32> to vector<16x32xf32>
    %19 = arith.mulf %18, %17 : vector<16x32xf32>
    %c0_7 = arith.constant 0 : index
    %c0_8 = arith.constant 0 : index
    %20 = vector.load %arg3[%c0_7, %c0_8] : memref<16x32xf32, #tpu.memory_space<vmem>>, vector<16x32xf32>
    tpu.vector_store %arg3[%c0_7, %c0_8], %19 {strides = array<i32>} : memref<16x32xf32, #tpu.memory_space<vmem>>, vector<16x32xf32>,
    return
  }
  func.func @transform_0(%arg0: i32) -> (i32, i32) {
    %c0_i32 = arith.constant 0 : i32
    %c0_i32_0 = arith.constant 0 : i32
    return %arg0, %c0_i32 : i32, i32
  }
  func.func @transform_1(%arg0: i32) -> (i32, i32) {
    %c0_i32 = arith.constant 0 : i32
    %c0_i32_0 = arith.constant 0 : i32
    %c0_i32_1 = arith.constant 0 : i32
    return %c0_i32, %c0_i32_0 : i32, i32
  }
  func.func @transform_2(%arg0: i32) -> (i32, i32) {
    %c0_i32 = arith.constant 0 : i32
    %c0_i32_0 = arith.constant 0 : i32
    return %arg0, %c0_i32 : i32, i32
  }
}

</mosaic_0001>

<llo_original>
// kernel: tpu_custom_call.1
$region0: #{tpu_custom_call.1}
  #allocation0 [shape = 'u32[]', space=smem, size = 0x4, offset = 0x4, fixed_abs, tag = 'smem constant byte address 0x4 - core index']
  #allocation1 [shape = 'u32[72,128]{1,0:T(1,128)}', space=vmem, size = 0x9000, scoped, tag = 'internal scratch']
  %s0 = inlined_call_operand.hbm [shape: f32[16,32], index: 0, kind: input, shape index: {}]
  %s1 = inlined_call_operand.hbm [shape: f32[1,32], index: 1, kind: input, shape index: {}]
  %s2 = inlined_call_operand.hbm [shape: f32[16,32], index: 2, kind: output, shape index: {}]
  %s3 = sld [smem:[#allocation0]]
  $region26: #{tpu_custom_call.1} parent=0
    _
  %s5 = ssub.s32 1, %s3
  %s6 = scalar_select 0, %s5, %s3
  $region1: #{tpu_custom_call.1} parent=0
    #allocation2 [shape = 'u8[8192]{0}', space=vmem, size = 0x2000, scoped, tag = 'input window, operand 0, single buffered']
    #allocation3 [shape = 's32[1]{0}', space=sflag, size = 0x4, scoped, tag = 'scoped memory for tpu_custom_call.1']
    #allocation4 [shape = 's32[1]{0}', space=sflag, size = 0x4, scoped, tag = 'scoped memory for tpu_custom_call.1']
    #allocation5 [shape = 'u8[512]{0}', space=vmem, size = 0x400, scoped, tag = 'input window, operand 1, single buffered']
    #allocation6 [shape = 's32[1]{0}', space=sflag, size = 0x4, scoped, tag = 'scoped memory for tpu_custom_call.1']
    #allocation7 [shape = 'u8[8192]{0}', space=vmem, size = 0x2000, scoped, tag = 'output window, operand 0, single buffered']
    %7 = vsyncpa [#allocation3], 0
    %8 = vsyncpa [#allocation6], 0
    %9 = vsyncpa [#allocation4], 0
    // Predicated region
    $region2: #{tpu_custom_call.1} parent=1 // pred_check
      _
    $region3: #{tpu_custom_call.1} parent=1 // pred_check_branch
      %11 = sbr.rel (0) target = $region5
    $region4: #{tpu_custom_call.1} parent=1 // pred_region
      %13 = vsyncadd [#allocation3], 0
      %s14 = sshll.u32 %s0, 4
      %s15 = int_to_ptr.hbm [resolvable:$true] %s14
      %s16 = sshll.u32 [#allocation2], 4
      %s17 = int_to_ptr.vmem [resolvable:$true] %s16
      %22 = dma.hbm_to_vmem [thread:$0]  %s15, 256, %s17, [#allocation3], 128, 128, 8
    $region5: #{tpu_custom_call.1} parent=1 // pred_fallthru
      _
    // Predicated region
    $region6: #{tpu_custom_call.1} parent=1 // pred_check
      _
    $region7: #{tpu_custom_call.1} parent=1 // pred_check_branch
      %24 = sbr.rel (0) target = $region9
    $region8: #{tpu_custom_call.1} parent=1 // pred_region
      %26 = vsyncadd [#allocation6], 0
      %s28 = sshll.u32 %s1, 4
      %s29 = int_to_ptr.hbm [resolvable:$true] %s28
      %s30 = sshll.u32 [#allocation5], 4
      %s31 = int_to_ptr.vmem [resolvable:$true] %s30
      %33 = dma.hbm_to_vmem [thread:$0]  %s29, 16, %s31, [#allocation6]
    $region9: #{tpu_custom_call.1} parent=1 // pred_fallthru
      _
    // Predicated region
    $region10: #{tpu_custom_call.1} parent=1 // pred_check
      _
    $region11: #{tpu_custom_call.1} parent=1 // pred_check_branch
      %35 = sbr.rel (0) target = $region13
    $region12: #{tpu_custom_call.1} parent=1 // pred_region
      %37 = dma.done [#allocation3], 256
    $region13: #{tpu_custom_call.1} parent=1 // pred_fallthru
      _
    // Predicated region
    $region14: #{tpu_custom_call.1} parent=1 // pred_check
      _
    $region15: #{tpu_custom_call.1} parent=1 // pred_check_branch
      %39 = sbr.rel (0) target = $region17
    $region16: #{tpu_custom_call.1} parent=1 // pred_region
      %41 = dma.done [#allocation6], 16
    $region17: #{tpu_custom_call.1} parent=1 // pred_fallthru
      _
    %v42 = vld [vmem:[#allocation2] sm:$0xff]
    %v43 = vld [vmem:[#allocation2 + $0x8] sm:$0xff]
    %vm44 = vcmask 261120
    %v45 = vsel %vm44, %v42, 0.0
    %46 = vadd.xlane.f32.xlu0 %v45
    %v47 = vpop.xlane.xlu0 %46
    %v48 = vsel %vm44, %v43, 0.0
    %49 = vadd.xlane.f32.xlu0 %v48
    %v50 = vpop.xlane.xlu0 %49
    %v51 = vmul.f32 %v47, 0.03125
    %v52 = vmul.f32 %v50, 0.03125
    %v53 = vsub.f32 %v42, %v51
    %v54 = vsub.f32 %v43, %v52
    %v55 = vmul.f32 %v53, %v53
    %v56 = vmul.f32 %v54, %v54
    %v57 = vsel %vm44, %v55, 0.0
    %58 = vadd.xlane.f32.xlu0 %v57
    %v59 = vpop.xlane.xlu0 %58
    %v60 = vsel %vm44, %v56, 0.0
    %61 = vadd.xlane.f32.xlu0 %v60
    %v62 = vpop.xlane.xlu0 %61
    %v63 = vmul.f32 %v59, 0.03125
    %v64 = vmul.f32 %v62, 0.03125
    %v65 = vadd.f32 %v63, 1e-08
    %v66 = vadd.f32 %v64, 1e-08
    %v67 = vrsqrt.pop %v65
    %v68 = vmul.f32 %v67, %v65
    %v69 = vmul.f32 %v68, %v67
    %v70 = vmul.f32 0.5, %v69
    %v71 = vsub.f32 1.5, %v70
    %v72 = vmul.f32 %v67, %v71
    %vm73 = vweird.f32 %v65
    %vm74 = vweird.f32 %v67
    %vm75 = vmor %vm73, %vm74
    %v76 = vsel %vm75, %v67, %v72
    %v77 = vrsqrt.pop %v66
    %v78 = vmul.f32 %v77, %v66
    %v79 = vmul.f32 %v78, %v77
    %v80 = vmul.f32 0.5, %v79
    %v81 = vsub.f32 1.5, %v80
    %v82 = vmul.f32 %v77, %v81
    %vm83 = vweird.f32 %v66
    %vm84 = vweird.f32 %v77
    %vm85 = vmor %vm83, %vm84
    %v86 = vsel %vm85, %v77, %v82
    %v87 = vld [vmem:[#allocation5] sm:$0x1]
    %v88 = vmul.f32 %v42, %v76
    %v89 = vmul.f32 %v43, %v86
    %v91 = vperm.slane %v87, 0
    %v93 = vmul.f32 %v91, %v88
    %v94 = vmul.f32 %v91, %v89
    %95 = vst.msk [vmem:[#allocation7] sm:$0xff] %vm44, %v93
    %96 = vst.msk [vmem:[#allocation7 + $0x8] sm:$0xff] %vm44, %v94
    // Predicated region
    $region18: #{tpu_custom_call.1} parent=1 // pred_check
      _
    $region19: #{tpu_custom_call.1} parent=1 // pred_check_branch
      %98 = sbr.rel (0) target = $region21
    $region20: #{tpu_custom_call.1} parent=1 // pred_region
      %100 = vsyncadd [#allocation4], 0
      %s101 = sshll.u32 [#allocation7], 4
      %s102 = int_to_ptr.vmem [resolvable:$true] %s101
      %s103 = sshll.u32 %s2, 4
      %s104 = int_to_ptr.hbm [resolvable:$true] %s103
      %109 = dma.vmem_to_hbm [thread:$0]  %s102, 256, %s104, [#allocation4], 128, 128, 8
    $region21: #{tpu_custom_call.1} parent=1 // pred_fallthru
      _
    // Predicated region
    $region22: #{tpu_custom_call.1} parent=1 // pred_check
      _
    $region23: #{tpu_custom_call.1} parent=1 // pred_check_branch
      %111 = sbr.rel (0) target = $region25
    $region24: #{tpu_custom_call.1} parent=1 // pred_region
      %113 = dma.done [#allocation4], 256
    $region25: #{tpu_custom_call.1} parent=1 // pred_fallthru
      _
    %114 = vsyncpa [#allocation3], 1
    %115 = vsyncpa [#allocation6], 1
    %116 = vsyncpa [#allocation4], 1

</llo_original>
